<compile_context>
chip_gen: v7x
topology: tpu7x:2x2x1
jax: 0.10.0
libtpu: 0.0.40
codegen_flags: <defaults>
</compile_context>

<pallas_src>
import functools
import math

import jax
import jax.numpy as jnp
import numpy as np
from jax.experimental import pallas as pl
from jax.experimental.pallas import tpu as pltpu


# ---------------------------------------------------------------------------
# Deterministic "parameter" init: the sinusoidal table from the module's
# __init__ / get_embedding (num_embeddings x embedding_dim, padding row zeroed).
# ---------------------------------------------------------------------------
def get_sinusoidal_table(num_embeddings, embedding_dim, padding_idx=None):
    half_dim = embedding_dim // 2
    scale = math.log(10000.0) / (half_dim - 1)
    inv_freq = jnp.exp(jnp.arange(half_dim, dtype=jnp.float32) * -scale)
    pos = jnp.arange(num_embeddings, dtype=jnp.float32)[:, None]
    ang = pos * inv_freq[None, :]
    emb = jnp.concatenate([jnp.sin(ang), jnp.cos(ang)], axis=1)
    emb = emb.reshape(num_embeddings, -1)
    if embedding_dim % 2 == 1:
        emb = jnp.concatenate(
            [emb, jnp.zeros((num_embeddings, 1), jnp.float32)], axis=1)
    if padding_idx is not None:
        emb = emb.at[padding_idx, :].set(0.0)
    return emb.astype(jnp.float32)


# ---------------------------------------------------------------------------
# Kernel.
# ---------------------------------------------------------------------------
def sinusoidal_pos_emb_kernel(tok_ref, triu_ref, w_ref, out_ref, carry_ref, *,
                              padding_idx):
    """tok_ref:   (tb, ts)      int32 token tile
       triu_ref:  (ts, ts)      bf16 upper-triangular ones (resident)
       w_ref:     (S_pad, D)    f32 sliced/zero-padded table (resident)
       out_ref:   (tb, ts, D)   f32 output block
       carry_ref: (tb, 1)       f32 running non-padding count per batch row."""
    seq_step = pl.program_id(1)

    @pl.when(seq_step == 0)
    def _():
        carry_ref[...] = jnp.zeros_like(carry_ref)

    tok = tok_ref[...]
    tb, ts = tok.shape
    s_pad, d = w_ref.shape

    mask = tok != padding_idx                                     # (tb, ts)

    # Inclusive cumsum over the sequence tile: one small bf16 MXU matmul
    # against the hoisted triangular matrix (exact: 0/1 operands, f32 acc,
    # counts << 2^24).
    local = jnp.dot(mask.astype(jnp.bfloat16), triu_ref[...],
                    preferred_element_type=jnp.float32)           # (tb, ts)
    cums = carry_ref[...] + local                                 # global count
    carry_ref[...] = cums[:, ts - 1:ts]                           # carry forward

    # Local row index into the sliced table: 0 for padding, else 1..S.
    idx = cums.astype(jnp.int32) * mask.astype(jnp.int32)         # (tb, ts)

    # Gather = one-hot selector @ table: single MXU matmul, bit-exact row copy
    # (f32 0/1 selector, f32 table).  Selector is built from a tiny (1,1,S_pad)
    # iota broadcast-compare -- no (tb,ts,S_pad) int32 iota -- and the reshape
    # only collapses leading dims (lane layout preserved, free for ts % 8 == 0).
    k_iota = jax.lax.broadcasted_iota(jnp.int32, (1, 1, s_pad), 2)
    onehot = (idx[:, :, None] == k_iota).astype(jnp.float32)      # (tb, ts, S_pad)
    rows = jnp.dot(onehot.reshape(tb * ts, s_pad), w_ref[...],
                   preferred_element_type=jnp.float32)            # (tb*ts, D)
    out_ref[...] = rows.reshape(tb, ts, d)


# ---------------------------------------------------------------------------
# Wrapper: table slicing/padding, batch & sequence tiling, layout glue.
# ---------------------------------------------------------------------------
def _round_up(x, m):
    return -(-x // m) * m


def sinusoidal_positional_embedding(tokens, weights, padding_idx):
    """tokens: (B, S) int; weights: (N, D) f32 sinusoidal table.
    Returns (B, S, D) f32, matching the PyTorch forward."""
    tokens = tokens.astype(jnp.int32)
    B, S = tokens.shape
    N, D = weights.shape

    # Mirror PyTorch: regrow the table if the sequence needs more rows.
    max_pos = padding_idx + 1 + S
    if max_pos > N:
        weights = get_sinusoidal_table(max_pos, D, padding_idx)
    weights = weights.astype(jnp.float32)

    # Only rows [padding_idx, padding_idx + S] are reachable; slice them and
    # zero-pad the row count to a multiple of 128 (aligned MXU K dim / DMA).
    s_pad = _round_up(S + 1, 128)
    w_local = jnp.pad(weights[padding_idx:padding_idx + S + 1],
                      ((0, s_pad - (S + 1)), (0, 0)))             # (S_pad, D)

    # Sequence tile: full S when small, else the largest 128-multiple divisor
    # (bounds the one-hot + output block per step; needed for v7x VMEM).
    ts = S
    for cand in (512, 256, 128):
        if S > cand and S % cand == 0:
            ts = cand
            break

    # Batch tile of 8 sublanes; pad batch so the "parallel" axis has >= 2
    # steps (v7x megacore) and stays pipelined for any B.  Pad rows are all
    # padding_idx -> zero embeddings, sliced off below.
    tb = 8
    num_b = max(2, pl.cdiv(B, tb))
    b_pad = num_b * tb
    if b_pad != B:
        tokens = jnp.concatenate(
            [tokens, jnp.full((b_pad - B, S), padding_idx, jnp.int32)], axis=0)

    # Hoisted upper-triangular cumsum matrix (resident input, DMA'd once).
    triu = (jnp.arange(ts)[:, None] <= jnp.arange(ts)[None, :]).astype(jnp.bfloat16)

    # Raise the scoped-VMEM limit above per-generation defaults when needed
    # (v5e default 16 MiB, v6e/v7x 32 MiB).
    per_step = (2 * tb * ts * D * 4          # output block (double-buffered)
                + 2 * tb * ts * 4            # token block
                + 2 * s_pad * D * 4          # resident table (2 bufs, see TODO)
                + 2 * ts * ts * 2            # resident triu
                + tb * ts * s_pad * 4        # one-hot temporary
                + tb * ts * D * 4)           # gathered rows temporary
    vmem_limit = int(min(100 * 2**20, max(32 * 2**20, 2 * per_step)))

    kernel = functools.partial(sinusoidal_pos_emb_kernel, padding_idx=padding_idx)
    out = pl.pallas_call(
        kernel,
        grid=(b_pad // tb, S // ts),
        in_specs=[
            pl.BlockSpec((tb, ts), lambda i, j: (i, j)),          # tokens
            pl.BlockSpec((ts, ts), lambda i, j: (0, 0)),          # triu (resident)
            pl.BlockSpec((s_pad, D), lambda i, j: (0, 0)),        # table (resident)
        ],
        out_specs=pl.BlockSpec((tb, ts, D), lambda i, j: (i, j, 0)),
        out_shape=jax.ShapeDtypeStruct((b_pad, S, D), jnp.float32),
        scratch_shapes=[pltpu.VMEM((tb, 1), jnp.float32)],        # cumsum carry
        compiler_params=pltpu.CompilerParams(
            dimension_semantics=("parallel", "arbitrary"),
            vmem_limit_bytes=vmem_limit),
    )(tokens, triu, w_local)
    return out[:B]


# Pure-JAX reference (mirrors the PyTorch forward) for validation.
def reference_forward(tokens, weights, padding_idx):
    mask = (tokens != padding_idx).astype(jnp.int32)
    positions = jnp.cumsum(mask, axis=1) * mask + padding_idx
    B, S = tokens.shape
    return weights[positions.reshape(-1)].reshape(B, S, -1)


if __name__ == "__main__":
    padding_idx = 1
    init_size = 1024
    key = jax.random.PRNGKey(0)
    k1, k2 = jax.random.split(key)

    # --- case 1: the module's small reference shape -------------------------
    embedding_dim, bsz, seq_len = 32, 2, 8
    weights = get_sinusoidal_table(init_size, embedding_dim, padding_idx)
    tokens = jax.random.randint(k1, (bsz, seq_len), 0, 50, dtype=jnp.int32)
    tokens = tokens.at[0, -2:].set(padding_idx)   # exercise the padding path
    tokens = tokens.at[1, -1:].set(padding_idx)

    out = jax.block_until_ready(
        sinusoidal_positional_embedding(tokens, weights, padding_idx))
    ref = reference_forward(tokens, weights, padding_idx)
    np.testing.assert_allclose(np.asarray(out), np.asarray(ref),
                               rtol=1e-6, atol=1e-6)
    assert out.shape == (bsz, seq_len, embedding_dim)
    assert out.dtype == jnp.float32

    # --- case 2: longer sequence -> exercises the seq-tile axis + carry -----
    embedding_dim2, seq_len2 = 64, 256
    weights2 = get_sinusoidal_table(init_size, embedding_dim2, padding_idx)
    tokens2 = jax.random.randint(k2, (bsz, seq_len2), 0, 50, dtype=jnp.int32)
    tokens2 = tokens2.at[0, 100:].set(padding_idx)   # tail crosses a seq tile
    tokens2 = tokens2.at[1, 200:].set(padding_idx)

    out2 = jax.block_until_ready(
        sinusoidal_positional_embedding(tokens2, weights2, padding_idx))
    ref2 = reference_forward(tokens2, weights2, padding_idx)
    np.testing.assert_allclose(np.asarray(out2), np.asarray(ref2),
                               rtol=1e-6, atol=1e-6)

    print("KERNEL_OK")
</pallas_src>

<mosaic_0001>
module attributes {stable_mosaic.version = 11 : i64} {
  func.func @sinusoidal_pos_emb_kernel(%arg0: i32, %arg1: i32, %arg2: memref<8x8xi32, #tpu.memory_space<vmem>>, %arg3: memref<8x8xbf16, #tpu.memory_space<vmem>>, %arg4: memref<128x32xf32, #tpu.memory_space<vmem>>, %arg5: memref<8x8x32xf32, #tpu.memory_space<vmem>>, %arg6: memref<8x1xf32, #tpu.memory_space<vmem>>) attributes {dimension_semantics = [#tpu.dimension_semantics<parallel>, #tpu.dimension_semantics<arbitrary>], iteration_bounds = array<i64: 2, 1>, scalar_prefetch = 0 : i64, scratch_operands = 1 : i64, tpu.core_type = #tpu.core_type<tc>, window_params = [{transform_indices = @transform_0, window_bounds = array<i64: 8, 8>}, {pipeline_mode = #tpu.pipeline_mode<synchronous>, transform_indices = @transform_1, window_bounds = array<i64: 8, 8>}, {pipeline_mode = #tpu.pipeline_mode<synchronous>, transform_indices = @transform_2, window_bounds = array<i64: 128, 32>}, {transform_indices = @transform_3, window_bounds = array<i64: 8, 8, 32>}]} {
    %c0_i32 = arith.constant 0 : i32
    %0 = arith.cmpi eq, %arg1, %c0_i32 : i32
    %1 = arith.extui %0 : i1 to i32
    %c0_i32_0 = arith.constant 0 : i32
    %2 = arith.cmpi ne, %1, %c0_i32_0 : i32
    scf.if %2 {
      %cst_14 = arith.constant 0.000000e+00 : f32
      %31 = vector.broadcast %cst_14 : f32 to vector<8x1xf32>
      %c0_15 = arith.constant 0 : index
      %c0_16 = arith.constant 0 : index
      %32 = vector.load %arg6[%c0_15, %c0_16] : memref<8x1xf32, #tpu.memory_space<vmem>>, vector<8x1xf32>
      tpu.vector_store %arg6[%c0_15, %c0_16], %31 {strides = array<i32>} : memref<8x1xf32, #tpu.memory_space<vmem>>, vector<8x1xf32>,
    } else {
    }
    %c0 = arith.constant 0 : index
    %c0_1 = arith.constant 0 : index
    %3 = vector.load %arg2[%c0, %c0_1] : memref<8x8xi32, #tpu.memory_space<vmem>>, vector<8x8xi32>
    %c1_i32 = arith.constant 1 : i32
    %4 = vector.broadcast %c1_i32 : i32 to vector<8x8xi32>
    %5 = arith.cmpi ne, %3, %4 : vector<8x8xi32>
    %6 = arith.extui %5 : vector<8x8xi1> to vector<8x8xi32>
    %7 = arith.sitofp %6 : vector<8x8xi32> to vector<8x8xf32>
    %8 = arith.truncf %7 : vector<8x8xf32> to vector<8x8xbf16>
    %c0_2 = arith.constant 0 : index
    %c0_3 = arith.constant 0 : index
    %9 = vector.load %arg3[%c0_2, %c0_3] : memref<8x8xbf16, #tpu.memory_space<vmem>>, vector<8x8xbf16>
    %cst = arith.constant dense<0.000000e+00> : vector<8x8xf32>
    %10 = tpu.matmul %8, %9, %cst {dimension_numbers = #tpu.dot_dimension_numbers<[1], [0], [0], [1], [0, 0, 1, 1], [], []>} : vector<8x8xbf16>, vector<8x8xbf16>, vector<8x8xf32> -> vector<8x8xf32>
    %c0_4 = arith.constant 0 : index
    %c0_5 = arith.constant 0 : index
    %11 = vector.load %arg6[%c0_4, %c0_5] : memref<8x1xf32, #tpu.memory_space<vmem>>, vector<8x1xf32>
    %12 = vector.broadcast %11 : vector<8x1xf32> to vector<8x8xf32>
    %13 = arith.addf %12, %10 : vector<8x8xf32>
    %14 = vector.extract_strided_slice %13 {offsets = [0, 7], sizes = [8, 1], strides = [1, 1]} : vector<8x8xf32> to vector<8x1xf32>
    %c0_6 = arith.constant 0 : index
    %c0_7 = arith.constant 0 : index
    %15 = vector.load %arg6[%c0_6, %c0_7] : memref<8x1xf32, #tpu.memory_space<vmem>>, vector<8x1xf32>
    tpu.vector_store %arg6[%c0_6, %c0_7], %14 {strides = array<i32>} : memref<8x1xf32, #tpu.memory_space<vmem>>, vector<8x1xf32>,
    %16 = arith.fptosi %13 : vector<8x8xf32> to vector<8x8xi32>
    %17 = arith.extui %5 : vector<8x8xi1> to vector<8x8xi32>
    %18 = arith.muli %16, %17 : vector<8x8xi32>
    %19 = tpu.iota {dimensions = array<i32: 2>} : vector<1x1x128xi32>
    %20 = vector.shape_cast %18 : vector<8x8xi32> to vector<8x8x1xi32>
    %21 = vector.broadcast %20 : vector<8x8x1xi32> to vector<8x8x128xi32>
    %22 = vector.broadcast %19 : vector<1x1x128xi32> to vector<8x8x128xi32>
    %23 = arith.cmpi eq, %21, %22 : vector<8x8x128xi32>
    %24 = arith.extui %23 : vector<8x8x128xi1> to vector<8x8x128xi32>
    %25 = arith.sitofp %24 : vector<8x8x128xi32> to vector<8x8x128xf32>
    %26 = vector.shape_cast %25 : vector<8x8x128xf32> to vector<64x128xf32>
    %c0_8 = arith.constant 0 : index
    %c0_9 = arith.constant 0 : index
    %27 = vector.load %arg4[%c0_8, %c0_9] : memref<128x32xf32, #tpu.memory_space<vmem>>, vector<128x32xf32>
    %cst_10 = arith.constant dense<0.000000e+00> : vector<64x32xf32>
    %28 = tpu.matmul %26, %27, %cst_10 {dimension_numbers = #tpu.dot_dimension_numbers<[1], [0], [0], [1], [0, 0, 1, 1], [], []>} : vector<64x128xf32>, vector<128x32xf32>, vector<64x32xf32> -> vector<64x32xf32>
    %29 = vector.shape_cast %28 : vector<64x32xf32> to vector<8x8x32xf32>
    %c0_11 = arith.constant 0 : index
    %c0_12 = arith.constant 0 : index
    %c0_13 = arith.constant 0 : index
    %30 = vector.load %arg5[%c0_11, %c0_12, %c0_13] : memref<8x8x32xf32, #tpu.memory_space<vmem>>, vector<8x8x32xf32>
    tpu.vector_store %arg5[%c0_11, %c0_12, %c0_13], %29 {strides = array<i32>} : memref<8x8x32xf32, #tpu.memory_space<vmem>>, vector<8x8x32xf32>,
    return
  }
  func.func @transform_0(%arg0: i32, %arg1: i32) -> (i32, i32) {
    %c0_i32 = arith.constant 0 : i32
    return %arg0, %arg1 : i32, i32
  }
  func.func @transform_1(%arg0: i32, %arg1: i32) -> (i32, i32) {
    %c0_i32 = arith.constant 0 : i32
    %c0_i32_0 = arith.constant 0 : i32
    %c0_i32_1 = arith.constant 0 : i32
    return %c0_i32, %c0_i32_0 : i32, i32
  }
  func.func @transform_2(%arg0: i32, %arg1: i32) -> (i32, i32) {
    %c0_i32 = arith.constant 0 : i32
    %c0_i32_0 = arith.constant 0 : i32
    %c0_i32_1 = arith.constant 0 : i32
    return %c0_i32, %c0_i32_0 : i32, i32
  }
  func.func @transform_3(%arg0: i32, %arg1: i32) -> (i32, i32, i32) {
    %c0_i32 = arith.constant 0 : i32
    %c0_i32_0 = arith.constant 0 : i32
    return %arg0, %arg1, %c0_i32 : i32, i32, i32
  }
}

</mosaic_0001>

<llo_original>
// kernel: tpu_custom_call.1
$region0: #{tpu_custom_call.1}
  #allocation0 [shape = 'u32[]', space=smem, size = 0x4, offset = 0x4, fixed_abs, tag = 'smem constant byte address 0x4 - core index']
  #allocation1 [shape = 'u32[144,128]{1,0:T(1,128)}', space=vmem, size = 0x12000, scoped, tag = 'internal scratch']
  #allocation2 [shape = 'f32[8,1]{1,0:T(8,128)}', space=vmem, size = 0x1000, scoped, tag = 'scratch operand']
  %s0 = inlined_call_operand.vmem [shape: s32[16,8], index: 0, kind: input, shape index: {}]
  %s1 = inlined_call_operand.vmem [shape: bf16[8,8], index: 1, kind: input, shape index: {}]
  %s2 = inlined_call_operand.vmem [shape: f32[128,32], index: 2, kind: input, shape index: {}]
  %s3 = inlined_call_operand.hbm [shape: f32[16,8,32], index: 3, kind: output, shape index: {}]
  %s4 = sld [smem:[#allocation0]]
  $region49: #{tpu_custom_call.1} parent=0
    _
  %s6 = ssub.s32 1, %s4
  %s7 = scalar_select 0, %s6, %s4
  $region1: #{tpu_custom_call.1} parent=0
    #allocation3 [shape = 'u8[65536]{0}', space=vmem, size = 0x10000, scoped, tag = 'output window, operand 0']
    #allocation4 [shape = 's32[2]{0}', space=sflag, size = 0x8, scoped, tag = 'scoped memory for tpu_custom_call.1']
    %8 = vsyncpa [#allocation4], 0
    %s9 = scalar_lea.sflag [#allocation4], 1
    %10 = vsyncpa %s9, 0
    loop: start=0, step=1, limit=4
    $region2: #{tpu_custom_call.1} parent=1 // loop_pre_header
      _
    $region3: #{tpu_custom_call.1} parent=1 // loop_header
      %s12 = sphi 0, %s16
      %p13 = scmp.ge.s32.totalorder %s12, 4
      %s19 = sphi 0, %s31
      %s20 = sphi 0, %s27
      %s21 = sphi 0, %s19
      %s22 = sphi 0, %s20
      %s23 = sphi 0, %s21
      %s24 = sphi 0, %s22
      %s36 = sphi 0, %s38
      %s39 = sphi 0, %s36
      %s40 = sphi 0, %s39
      %s56 = sphi 0, %s40
      %s60 = sphi 0, %s60
      %s62 = sphi 0, %s60
      %s63 = sphi 0, %s62
      %s77 = sphi 0, %s63
      %s81 = sphi 0, %s81
      %s83 = sphi 0, %s81
      %s84 = sphi 0, %s83
      %s98 = sphi 0, %s84
      %s106 = sphi 0, %s108
      %s109 = sphi 0, %s106
      %s110 = sphi 0, %s109
      %s126 = sphi 0, %s110
    $region4: #{tpu_custom_call.1} parent=1 // loop_header_branch
      %15 = sbr.rel (%p13) target = $region8
    $region5: #{tpu_custom_call.1} parent=1 // loop_body
      %s17 = ssub.s32 %s12, 1
      %s18 = ssub.s32 %s12, 2
      %s25 = sadd.s32 1, %s20
      %p26 = scmp.ge.s32.totalorder %s25, 1
      %s27 = scalar_select %p26, 0, %s25
      %s28 = sadd.s32 1, %s19
      %s29 = scalar_select %p26, %s28, %s19
      %p30 = scmp.ge.s32.totalorder %s29, 2
      %s31 = scalar_select %p30, 0, %s29
      %s32 = ssub.s32 %s19, %s31
      %s33 = ssub.s32 %s20, %s27
      %s34 = sor.u32 %s32, %s33
      %p35 = scmp.eq.s32.totalorder %s34, 0
      %s37 = sadd.s32 %s36, 1
      %s38 = scalar_select %p35, %s36, %s37
      %p41 = pneg %p35
      %p42 = scmp.eq.s32.totalorder %s12, 1
      %p43 = por %p41, %p42
      %p44 = scmp.ne.s32.totalorder %s36, %s39
      %p45 = scmp.eq.s32.totalorder %s12, 0
      %p46 = por %p44, %p45
      %p47 = scmp.ne.s32.totalorder %s36, %s39
      %p48 = scmp.eq.s32.totalorder %s17, 1
      %p49 = por %p47, %p48
      %p50 = scmp.ne.s32.totalorder %s39, %s40
      %p51 = scmp.eq.s32.totalorder %s17, 0
      %p52 = por %p50, %p51
      %p53 = scmp.ne.s32.totalorder %s39, %s40
      %p54 = scmp.eq.s32.totalorder %s18, 1
      %p55 = por %p53, %p54
      %p57 = scmp.ne.s32.totalorder %s40, %s56
      %p58 = scmp.eq.s32.totalorder %s18, 0
      %p59 = por %p57, %p58
      %s61 = sadd.s32 %s60, 1
      %p64 = scmp.eq.s32.totalorder %s12, 1
      %p65 = scmp.ne.s32.totalorder %s60, %s62
      %p66 = scmp.eq.s32.totalorder %s12, 0
      %p67 = por %p65, %p66
      %p68 = scmp.ne.s32.totalorder %s60, %s62
      %p69 = scmp.eq.s32.totalorder %s17, 1
      %p70 = por %p68, %p69
      %p71 = scmp.ne.s32.totalorder %s62, %s63
      %p72 = scmp.eq.s32.totalorder %s17, 0
      %p73 = por %p71, %p72
      %p74 = scmp.ne.s32.totalorder %s62, %s63
      %p75 = scmp.eq.s32.totalorder %s18, 1
      %p76 = por %p74, %p75
      %p78 = scmp.ne.s32.totalorder %s63, %s77
      %p79 = scmp.eq.s32.totalorder %s18, 0
      %p80 = por %p78, %p79
      %s82 = sadd.s32 %s81, 1
      %p85 = scmp.eq.s32.totalorder %s12, 1
      %p86 = scmp.ne.s32.totalorder %s81, %s83
      %p87 = scmp.eq.s32.totalorder %s12, 0
      %p88 = por %p86, %p87
      %p89 = scmp.ne.s32.totalorder %s81, %s83
      %p90 = scmp.eq.s32.totalorder %s17, 1
      %p91 = por %p89, %p90
      %p92 = scmp.ne.s32.totalorder %s83, %s84
      %p93 = scmp.eq.s32.totalorder %s17, 0
      %p94 = por %p92, %p93
      %p95 = scmp.ne.s32.totalorder %s83, %s84
      %p96 = scmp.eq.s32.totalorder %s18, 1
      %p97 = por %p95, %p96
      %p99 = scmp.ne.s32.totalorder %s84, %s98
      %p100 = scmp.eq.s32.totalorder %s18, 0
      %p101 = por %p99, %p100
      %s102 = ssub.s32 %s19, %s31
      %s103 = ssub.s32 %s20, %s27
      %s104 = sor.u32 %s102, %s103
      %p105 = scmp.eq.s32.totalorder %s104, 0
      %s107 = sadd.s32 %s106, 1
      %s108 = scalar_select %p105, %s106, %s107
      %p111 = pneg %p105
      %p112 = scmp.eq.s32.totalorder %s12, 1
      %p113 = por %p111, %p112
      %p114 = scmp.ne.s32.totalorder %s106, %s109
      %p115 = scmp.eq.s32.totalorder %s12, 0
      %p116 = por %p114, %p115
      %p117 = scmp.ne.s32.totalorder %s106, %s109
      %p118 = scmp.eq.s32.totalorder %s17, 1
      %p119 = por %p117, %p118
      %p120 = scmp.ne.s32.totalorder %s109, %s110
      %p121 = scmp.eq.s32.totalorder %s17, 0
      %p122 = por %p120, %p121
      %p123 = scmp.ne.s32.totalorder %s109, %s110
      %p124 = scmp.eq.s32.totalorder %s18, 1
      %p125 = por %p123, %p124
      %p127 = scmp.ne.s32.totalorder %s110, %s126
      %p128 = scmp.eq.s32.totalorder %s18, 0
      %p129 = por %p127, %p128
      %p130 = scmp.le.s32.totalorder 1, %s12
      %p131 = scmp.lt.s32.totalorder %s12, 3
      %p132 = pnand %p130, %p131
      %p133 = pneg %p132
      // Predicated region
      $region9: #{tpu_custom_call.1} parent=5 // pred_check
        _
      $region10: #{tpu_custom_call.1} parent=5 // pred_check_branch
        %135 = sbr.rel (%p132) target = $region12
      $region11: #{tpu_custom_call.1} parent=5 // pred_region
        %s136 = ssub.s32 %s12, 1
        // Predicated region
        $region13: #{tpu_custom_call.1} parent=11 // pred_check
          %p137 = pneg %p73
        $region14: #{tpu_custom_call.1} parent=11 // pred_check_branch
          %139 = sbr.rel (%p137) target = $region16
        $region15: #{tpu_custom_call.1} parent=11 // pred_region
          _
        $region16: #{tpu_custom_call.1} parent=11 // pred_fallthru
          _
        // Predicated region
        $region17: #{tpu_custom_call.1} parent=11 // pred_check
          %p140 = pneg %p94
        $region18: #{tpu_custom_call.1} parent=11 // pred_check_branch
          %142 = sbr.rel (%p140) target = $region20
        $region19: #{tpu_custom_call.1} parent=11 // pred_region
          _
        $region20: #{tpu_custom_call.1} parent=11 // pred_fallthru
          _
      $region12: #{tpu_custom_call.1} parent=5 // pred_fallthru
        _
      %p143 = scmp.lt.s32.totalorder %s12, 2
      // Predicated region
      $region21: #{tpu_custom_call.1} parent=5 // pred_check
        %p144 = pneg %p143
      $region22: #{tpu_custom_call.1} parent=5 // pred_check_branch
        %146 = sbr.rel (%p144) target = $region24
      $region23: #{tpu_custom_call.1} parent=5 // pred_region
        // Predicated region
        $region25: #{tpu_custom_call.1} parent=23 // pred_check
          %p147 = pneg %p46
        $region26: #{tpu_custom_call.1} parent=23 // pred_check_branch
          %149 = sbr.rel (%p147) target = $region28
        $region27: #{tpu_custom_call.1} parent=23 // pred_region
          %p150 = scmp.lt.s32.totalorder %s19, 1
          %s151 = scalar_select %p150, %s19, 1
          %p152 = scmp.lt.s32.totalorder %s20, 0
          %s153 = scalar_select %p152, %s20, 0
          %s154 = sadd.s32 %s153, %s151
          %s155 = smul.addr %s154, 8
          %s156 = scalar_lea.vmem %s0, %s155
        $region28: #{tpu_custom_call.1} parent=23 // pred_fallthru
          _
      $region24: #{tpu_custom_call.1} parent=5 // pred_fallthru
        _
      %p157 = scmp.le.s32.totalorder 1, %s12
      %p158 = scmp.lt.s32.totalorder %s12, 3
      %p159 = pnand %p157, %p158
      %p160 = pneg %p159
      // Predicated region
      $region29: #{tpu_custom_call.1} parent=5 // pred_check
        _
      $region30: #{tpu_custom_call.1} parent=5 // pred_check_branch
        %162 = sbr.rel (%p159) target = $region32
      $region31: #{tpu_custom_call.1} parent=5 // pred_region
        %s163 = ssub.s32 %s12, 1
        %p164 = scmp.lt.s32.totalorder %s21, 1
        %s165 = scalar_select %p164, %s21, 1
        %p166 = scmp.lt.s32.totalorder %s22, 0
        %s167 = scalar_select %p166, %s22, 0
        %s168 = sadd.s32 %s167, %s165
        %s169 = smul.addr %s168, 8
        %s170 = scalar_lea.vmem %s0, %s169
        %p171 = pneg %p52
        %p172 = pneg %p49
        %p173 = pneg %p73
        %p174 = pneg %p70
        %p175 = pneg %p94
        %p176 = pneg %p91
        %p177 = pneg %p122
        %p178 = pneg %p119
        %s179 = sand.u32 %s109, 1
        %s180 = scalar_lea.sflag [#allocation4], %s179
        %s181 = sand.u32 %s109, 1
        %s182 = smul.addr %s181, 64
        %s183 = scalar_lea.vmem [#allocation3], %s182
        %p184 = scmp.lt.s32.totalorder %s21, 1
        %s185 = scalar_select %p184, %s21, 1
        %p186 = scmp.lt.s32.totalorder %s22, 0
        %s187 = scalar_select %p186, %s22, 0
        %s188 = sadd.s32 %s187, %s185
        %s189 = smul.addr %s188, 8
        %s190 = scalar_lea.vmem %s0, %s189
        %s191 = smul.u32 8, %s21
        %p193 = scmp.eq.s32.totalorder %s22, 0
        // Predicated region
        $region33: #{tpu_custom_call.1} parent=31 // pred_check
          %p194 = pneg %p193
        $region34: #{tpu_custom_call.1} parent=31 // pred_check_branch
          %196 = sbr.rel (%p194) target = $region36
        $region35: #{tpu_custom_call.1} parent=31 // pred_region
          %vm197 = vcmask 7168
          %198 = vst.msk [vmem:[#allocation2] sm:$0xff] %vm197, 0.0
        $region36: #{tpu_custom_call.1} parent=31 // pred_fallthru
          _
        %v199 = vld [vmem:[%s190] sm:$0xff]
        %vm200 = vcmp.ne.s32.totalorder %v199, 1
        %v201 = vsel %vm200, 1, 0
        %v202 = vcvt.s32.f32 %v201
        %v203 = vpack.c.bf16 %v202, %v202
        %v204 = vld [vmem:[%s1] sm:$0xf]
        %vm205 = vcmask 64512
        %v207 = vsel %vm205, %v203, 0
        %vm209 = vcmask 1043456
        %v211 = vsel %vm209, %v204, 0
        %213 = vmatprep.subr.bf16.mxu0 0
        %214 = vmatpush1.bf16.msra.mxu0 %v211
        %215 = vmatprep.subr.bf16.mxu0 0
        %216 = vmatpush1.bf16.msra.mxu0 0
        %217 = vmatprep.subr.bf16.mxu0 0
        %218 = vmatpush1.bf16.msra.mxu0 0
        %219 = vmatprep.subr.bf16.mxu0 0
        %220 = vmatpush1.bf16.msra.mxu0 0
        %221 = vmatprep.subr.bf16.mxu0 0
        %222 = vmatpush1.bf16.msra.mxu0 0
        %223 = vmatprep.subr.bf16.mxu0 0
        %224 = vmatpush1.bf16.msra.mxu0 0
        %225 = vmatprep.subr.bf16.mxu0 0
        %226 = vmatpush1.bf16.msra.mxu0 0
        %227 = vmatprep.subr.bf16.mxu0 0
        %228 = vmatpush1.bf16.msra.mxu0 0
        %229 = vmatprep.subr.bf16.mxu0 0
        %230 = vmatpush1.bf16.msra.mxu0 0
        %231 = vmatprep.subr.bf16.mxu0 0
        %232 = vmatpush1.bf16.msra.mxu0 0
        %233 = vmatprep.subr.bf16.mxu0 0
        %234 = vmatpush1.bf16.msra.mxu0 0
        %235 = vmatprep.subr.bf16.mxu0 0
        %236 = vmatpush1.bf16.msra.mxu0 0
        %237 = vmatprep.subr.bf16.mxu0 0
        %238 = vmatpush1.bf16.msra.mxu0 0
        %239 = vmatprep.subr.bf16.mxu0 0
        %240 = vmatpush1.bf16.msra.mxu0 0
        %241 = vmatprep.subr.bf16.mxu0 0
        %242 = vmatpush1.bf16.msra.mxu0 0
        %243 = vmatprep.subr.bf16.mxu0 0
        %244 = vmatpush1.bf16.msra.mxu0 0
        %245 = vmatprep.mubr.bf16.mxu0 0
        %246 = vmatmul.mubr.bf16.gmra.mrb[0].mxu0 %v207
        %v247 = vpop.f32.mrb[0].mxu0
        %v248 = vadd.f32 0.0, %v247
        %v249 = vpop.f32.mrb[0].mxu0
        %v250 = vpop.f32.mrb[0].mxu0
        %v251 = vpop.f32.mrb[0].mxu0
        %252 = vdwg.mxu0
        %v253 = vld [vmem:[#allocation2] sm:$0xff]
        %255 = vset.pattern.permute.xlu0 0
        %256 = vperm.xlu0 %255, %v253
        %v257 = vpop.permute.xlu0 %256
        %v259 = vadd.f32 %v257, %v248
        %261 = vrot.lane.b32.xlu0 %v259, 121
        %v262 = vpop.permute.xlu0 %261
        %vm264 = vcmask 7168
        %265 = vst.msk [vmem:[#allocation2] sm:$0xff] %vm264, %v262
        %v266 = vcvt.f32.s32.to.zero.pseudo %v259
        %v267 = vmul.u32 %v266, %v201
        %v268 = vlaneseq
        %v269 = vand.u32 %v268, 127
        %v270 = vlaneseq
        %v271 = vshrl.u32 %v270, 7
        %v272 = vsub.s32 0, %v271
        %v273 = vrot.slane %v267, %v272
        %275 = vbcast.lane.b32.xlu0 %v273, 256
        %v276 = vpop.permute.xlu0 %275
        %v277 = vlaneseq
        %v278 = vshrl.u32 %v277, 7
        %v279 = vsub.s32 1, %v278
        %v280 = vrot.slane %v267, %v279
        %282 = vbcast.lane.b32.xlu0 %v280, 256
        %v283 = vpop.permute.xlu0 %282
        %v284 = vlaneseq
        %v285 = vshrl.u32 %v284, 7
        %v286 = vsub.s32 2, %v285
        %v287 = vrot.slane %v267, %v286
        %289 = vbcast.lane.b32.xlu0 %v287, 256
        %v290 = vpop.permute.xlu0 %289
        %v291 = vlaneseq
        %v292 = vshrl.u32 %v291, 7
        %v293 = vsub.s32 3, %v292
        %v294 = vrot.slane %v267, %v293
        %296 = vbcast.lane.b32.xlu0 %v294, 256
        %v297 = vpop.permute.xlu0 %296
        %v298 = vlaneseq
        %v299 = vshrl.u32 %v298, 7
        %v300 = vsub.s32 4, %v299
        %v301 = vrot.slane %v267, %v300
        %303 = vbcast.lane.b32.xlu0 %v301, 256
        %v304 = vpop.permute.xlu0 %303
        %v305 = vlaneseq
        %v306 = vshrl.u32 %v305, 7
        %v307 = vsub.s32 5, %v306
        %v308 = vrot.slane %v267, %v307
        %310 = vbcast.lane.b32.xlu0 %v308, 256
        %v311 = vpop.permute.xlu0 %310
        %v312 = vlaneseq
        %v313 = vshrl.u32 %v312, 7
        %v314 = vsub.s32 6, %v313
        %v315 = vrot.slane %v267, %v314
        %317 = vbcast.lane.b32.xlu0 %v315, 256
        %v318 = vpop.permute.xlu0 %317
        %v319 = vlaneseq
        %v320 = vshrl.u32 %v319, 7
        %v321 = vsub.s32 7, %v320
        %v322 = vrot.slane %v267, %v321
        %324 = vbcast.lane.b32.xlu0 %v322, 256
        %v325 = vpop.permute.xlu0 %324
        %vm326 = vcmp.eq.s32.totalorder %v276, %v269
        %vm327 = vcmp.eq.s32.totalorder %v283, %v269
        %vm328 = vcmp.eq.s32.totalorder %v290, %v269
        %vm329 = vcmp.eq.s32.totalorder %v297, %v269
        %vm330 = vcmp.eq.s32.totalorder %v304, %v269
        %vm331 = vcmp.eq.s32.totalorder %v311, %v269
        %vm332 = vcmp.eq.s32.totalorder %v318, %v269
        %vm333 = vcmp.eq.s32.totalorder %v325, %v269
        %v334 = vsel %vm326, 1, 0
        %v335 = vsel %vm327, 1, 0
        %v336 = vsel %vm328, 1, 0
        %v337 = vsel %vm329, 1, 0
        %v338 = vsel %vm330, 1, 0
        %v339 = vsel %vm331, 1, 0
        %v340 = vsel %vm332, 1, 0
        %v341 = vsel %vm333, 1, 0
        %v342 = vcvt.s32.f32 %v334
        %v343 = vcvt.s32.f32 %v335
        %v344 = vcvt.s32.f32 %v336
        %v345 = vcvt.s32.f32 %v337
        %v346 = vcvt.s32.f32 %v338
        %v347 = vcvt.s32.f32 %v339
        %v348 = vcvt.s32.f32 %v340
        %v349 = vcvt.s32.f32 %v341
        %v350 = vld [vmem:[%s2] sm:$0xff]
        %v351 = vld [vmem:[%s2 + $0x8] sm:$0xff]
        %v352 = vld [vmem:[%s2 + $0x10] sm:$0xff]
        %v353 = vld [vmem:[%s2 + $0x18] sm:$0xff]
        %v354 = vld [vmem:[%s2 + $0x20] sm:$0xff]
        %v355 = vld [vmem:[%s2 + $0x28] sm:$0xff]
        %v356 = vld [vmem:[%s2 + $0x30] sm:$0xff]
        %v357 = vld [vmem:[%s2 + $0x38] sm:$0xff]
        %v358 = vld [vmem:[%s2 + $0x40] sm:$0xff]
        %v359 = vld [vmem:[%s2 + $0x48] sm:$0xff]
        %v360 = vld [vmem:[%s2 + $0x50] sm:$0xff]
        %v361 = vld [vmem:[%s2 + $0x58] sm:$0xff]
        %v362 = vld [vmem:[%s2 + $0x60] sm:$0xff]
        %v363 = vld [vmem:[%s2 + $0x68] sm:$0xff]
        %v364 = vld [vmem:[%s2 + $0x70] sm:$0xff]
        %v365 = vld [vmem:[%s2 + $0x78] sm:$0xff]
        %366 = vmatprep.subr.mxu0 0.0
        %367 = vmatpush1.msra.mxu0 %v350
        %368 = vmatprep.subr.mxu0 0.0
        %369 = vmatpush1.msra.mxu0 %v351
        %370 = vmatprep.subr.mxu0 0.0
        %371 = vmatpush1.msra.mxu0 %v352
        %372 = vmatprep.subr.mxu0 0.0
        %373 = vmatpush1.msra.mxu0 %v353
        %374 = vmatprep.subr.mxu0 0.0
        %375 = vmatpush1.msra.mxu0 %v354
        %376 = vmatprep.subr.mxu0 0.0
        %377 = vmatpush1.msra.mxu0 %v355
        %378 = vmatprep.subr.mxu0 0.0
        %379 = vmatpush1.msra.mxu0 %v356
        %380 = vmatprep.subr.mxu0 0.0
        %381 = vmatpush1.msra.mxu0 %v357
        %382 = vmatprep.subr.mxu0 0.0
        %383 = vmatpush1.msra.mxu0 %v358
        %384 = vmatprep.subr.mxu0 0.0
        %385 = vmatpush1.msra.mxu0 %v359
        %386 = vmatprep.subr.mxu0 0.0
        %387 = vmatpush1.msra.mxu0 %v360
        %388 = vmatprep.subr.mxu0 0.0
        %389 = vmatpush1.msra.mxu0 %v361
        %390 = vmatprep.subr.mxu0 0.0
        %391 = vmatpush1.msra.mxu0 %v362
        %392 = vmatprep.subr.mxu0 0.0
        %393 = vmatpush1.msra.mxu0 %v363
        %394 = vmatprep.subr.mxu0 0.0
        %395 = vmatpush1.msra.mxu0 %v364
        %396 = vmatprep.subr.mxu0 0.0
        %397 = vmatpush1.msra.mxu0 %v365
        %398 = vmatprep.subr.mxu0 0.0
        %399 = vmatpush1.msra.mxu0 0.0
        %400 = vmatprep.subr.mxu0 0.0
        %401 = vmatpush1.msra.mxu0 0.0
        %402 = vmatprep.subr.mxu0 0.0
        %403 = vmatpush1.msra.mxu0 0.0
        %404 = vmatprep.subr.mxu0 0.0
        %405 = vmatpush1.msra.mxu0 0.0
        %406 = vmatprep.subr.mxu0 0.0
        %407 = vmatpush1.msra.mxu0 0.0
        %408 = vmatprep.subr.mxu0 0.0
        %409 = vmatpush1.msra.mxu0 0.0
        %410 = vmatprep.subr.mxu0 0.0
        %411 = vmatpush1.msra.mxu0 0.0
        %412 = vmatprep.subr.mxu0 0.0
        %413 = vmatpush1.msra.mxu0 0.0
        %414 = vmatprep.subr.mxu0 0.0
        %415 = vmatpush1.msra.mxu0 0.0
        %416 = vmatprep.subr.mxu0 0.0
        %417 = vmatpush1.msra.mxu0 0.0
        %418 = vmatprep.subr.mxu0 0.0
        %419 = vmatpush1.msra.mxu0 0.0
        %420 = vmatprep.subr.mxu0 0.0
        %421 = vmatpush1.msra.mxu0 0.0
        %422 = vmatprep.subr.mxu0 0.0
        %423 = vmatpush1.msra.mxu0 0.0
        %424 = vmatprep.subr.mxu0 0.0
        %425 = vmatpush1.msra.mxu0 0.0
        %426 = vmatprep.subr.mxu0 0.0
        %427 = vmatpush1.msra.mxu0 0.0
        %428 = vmatprep.subr.mxu0 0.0
        %429 = vmatpush1.msra.mxu0 0.0
        %430 = vmatprep.mubr.f32.mxu0 0.0
        %431 = vmatmul.mubr.f32.gmra.mrb[0].mxu0 %v342
        %v432 = vpop.f32.mrb[0].mxu0
        %v433 = vadd.f32 0.0, %v432
        %v434 = vpop.f32.mrb[0].mxu0
        %435 = vmatprep.mubr.f32.mxu0 0.0
        %436 = vmatmul.mubr.f32.gmra.mrb[0].mxu0 %v343
        %v437 = vpop.f32.mrb[0].mxu0
        %v438 = vadd.f32 0.0, %v437
        %v439 = vpop.f32.mrb[0].mxu0
        %440 = vmatprep.mubr.f32.mxu0 0.0
        %441 = vmatmul.mubr.f32.gmra.mrb[0].mxu0 %v344
        %v442 = vpop.f32.mrb[0].mxu0
        %v443 = vadd.f32 0.0, %v442
        %v444 = vpop.f32.mrb[0].mxu0
        %445 = vmatprep.mubr.f32.mxu0 0.0
        %446 = vmatmul.mubr.f32.gmra.mrb[0].mxu0 %v345
        %v447 = vpop.f32.mrb[0].mxu0
        %v448 = vadd.f32 0.0, %v447
        %v449 = vpop.f32.mrb[0].mxu0
        %450 = vmatprep.mubr.f32.mxu0 0.0
        %451 = vmatmul.mubr.f32.gmra.mrb[0].mxu0 %v346
        %v452 = vpop.f32.mrb[0].mxu0
        %v453 = vadd.f32 0.0, %v452
        %v454 = vpop.f32.mrb[0].mxu0
        %455 = vmatprep.mubr.f32.mxu0 0.0
        %456 = vmatmul.mubr.f32.gmra.mrb[0].mxu0 %v347
        %v457 = vpop.f32.mrb[0].mxu0
        %v458 = vadd.f32 0.0, %v457
        %v459 = vpop.f32.mrb[0].mxu0
        %460 = vmatprep.mubr.f32.mxu0 0.0
        %461 = vmatmul.mubr.f32.gmra.mrb[0].mxu0 %v348
        %v462 = vpop.f32.mrb[0].mxu0
        %v463 = vadd.f32 0.0, %v462
        %v464 = vpop.f32.mrb[0].mxu0
        %465 = vmatprep.mubr.f32.mxu0 0.0
        %466 = vmatmul.mubr.f32.gmra.mrb[0].mxu0 %v349
        %v467 = vpop.f32.mrb[0].mxu0
        %v468 = vadd.f32 0.0, %v467
        %v469 = vpop.f32.mrb[0].mxu0
        %470 = vdwg.mxu0
        %vm471 = vcmask 261120
        %472 = vst.msk [vmem:[%s183] sm:$0xff] %vm471, %v433
        %473 = vst.msk [vmem:[%s183 + $0x8] sm:$0xff] %vm471, %v438
        %474 = vst.msk [vmem:[%s183 + $0x10] sm:$0xff] %vm471, %v443
        %475 = vst.msk [vmem:[%s183 + $0x18] sm:$0xff] %vm471, %v448
        %476 = vst.msk [vmem:[%s183 + $0x20] sm:$0xff] %vm471, %v453
        %477 = vst.msk [vmem:[%s183 + $0x28] sm:$0xff] %vm471, %v458
        %478 = vst.msk [vmem:[%s183 + $0x30] sm:$0xff] %vm471, %v463
        %479 = vst.msk [vmem:[%s183 + $0x38] sm:$0xff] %vm471, %v468
        %s480 = sand.u32 %s109, 1
        %s481 = scalar_lea.sflag [#allocation4], %s480
        %s482 = sand.u32 %s109, 1
        %s483 = smul.addr %s482, 64
        %s484 = scalar_lea.vmem [#allocation3], %s483
        // Predicated region
        $region37: #{tpu_custom_call.1} parent=31 // pred_check
          %p485 = pneg %p119
        $region38: #{tpu_custom_call.1} parent=31 // pred_check_branch
          %487 = sbr.rel (%p485) target = $region40
        $region39: #{tpu_custom_call.1} parent=31 // pred_region
          %s488 = smul.u32 8, %s21
          %s490 = ssub.s32 1024, 1024
          %491 = vsyncadd %s481, %s490
          %s492 = sadd.s32 %s22, %s488
          %s493 = smul.addr %s492, 128
          %s494 = scalar_lea.hbm %s3, %s493
          %s495 = sshll.u32 %s484, 4
          %s496 = int_to_ptr.vmem [resolvable:$true] %s495
          %501 = dma.vmem_to_hbm [thread:$0]  %s496, 1024, %s494, %s481, 128, 128, 8
        $region40: #{tpu_custom_call.1} parent=31 // pred_fallthru
          _
      $region32: #{tpu_custom_call.1} parent=5 // pred_fallthru
        _
      %p502 = scmp.le.s32.totalorder 2, %s12
      // Predicated region
      $region41: #{tpu_custom_call.1} parent=5 // pred_check
        %p503 = pneg %p502
      $region42: #{tpu_custom_call.1} parent=5 // pred_check_branch
        %505 = sbr.rel (%p503) target = $region44
      $region43: #{tpu_custom_call.1} parent=5 // pred_region
        %s506 = ssub.s32 %s12, 2
        // Predicated region
        $region45: #{tpu_custom_call.1} parent=43 // pred_check
          %p507 = pneg %p125
        $region46: #{tpu_custom_call.1} parent=43 // pred_check_branch
          %509 = sbr.rel (%p507) target = $region48
        $region47: #{tpu_custom_call.1} parent=43 // pred_region
          %s510 = sand.u32 %s110, 1
          %s511 = scalar_lea.sflag [#allocation4], %s510
          %s512 = sand.u32 %s110, 1
          %s513 = smul.addr %s512, 64
          %s514 = scalar_lea.vmem [#allocation3], %s513
          %515 = dma.done %s511, 1024
        $region48: #{tpu_custom_call.1} parent=43 // pred_fallthru
          _
      $region44: #{tpu_custom_call.1} parent=5 // pred_fallthru
        _
    $region6: #{tpu_custom_call.1} parent=1 // loop_footer
      %s16 = sadd.s32 1, %s12
    $region7: #{tpu_custom_call.1} parent=1 // loop_footer_branch
      %11 = sbr.rel target = $region3
    $region8: #{tpu_custom_call.1} parent=1 // loop_exit
      _
    %516 = vsyncpa [#allocation4], 1
    %s517 = scalar_lea.sflag [#allocation4], 1
    %518 = vsyncpa %s517, 1

</llo_original>
